<compile_context>
chip_gen: v5e
topology: v5e:2x2
jax: 0.10.0
libtpu: 0.0.40
codegen_flags: <defaults>
</compile_context>

<pallas_src>
import functools

import jax
import jax.numpy as jnp
from jax.experimental import pallas as pl
from jax.experimental.pallas import tpu as pltpu

LANE = 128  # one vreg lane tile; everything in the kernel runs at this lane width


def _context_classifier_kernel(data_ref, p_ref, enc_ref, loss_ref, logits_ref,
                               *, T, B, E, offs):
    """Gridless single-shot kernel; the whole (toy-sized) problem is VMEM resident.

    data_ref  : (N, 256)  VMEM  -- cols [0:128)  = [features | 1 | 0...]  (x block)
                                   cols [128:256) = [eps | 0...]          (eps block)
    p_ref     : (784, 128) VMEM -- six 128x128 weight blocks (bias folded in as an
                                   extra row) + std row + klrow row, all lane-dense
    enc_ref   : (B, 128)  VMEM out (valid lanes [0:E))
    loss_ref  : (1, 1)    SMEM out (scalar KL loss)
    logits_ref: (B, 128)  VMEM out (valid lanes [0:num_tasks))
    """
    N = T * B

    def W(name):                               # full 128x128 aligned view -> plain vld
        o = offs[name]                         # static Python int offsets
        return p_ref[o:o + LANE, :]

    x = data_ref[:, 0:LANE]                    # (N,128) lane-aligned slice
    eps = data_ref[:, LANE:2 * LANE]           # (N,128) lane-aligned slice

    # ----- MLPEncoder FlattenMlp: biases ride the MXU via the constant-1 input lane
    #       (column `din` of x; each block regenerates the 1-lane at column H) -----
    h = jnp.maximum(jnp.dot(x, W("w1"), preferred_element_type=jnp.float32), 0.0)
    h = jnp.maximum(jnp.dot(h, W("w2"), preferred_element_type=jnp.float32), 0.0)
    mu = jnp.dot(h, W("w3"), preferred_element_type=jnp.float32)   # (N,128), pads == 0

    # ----- stochastic head (rsample) + tanh; std = sqrt(clamp(exp(log_var))) is
    #       parameter-only and was precomputed at param-packing time -----
    std = p_ref[offs["std"]:offs["std"] + 1, :]                    # (1,128), pads == 0
    z = jnp.tanh(mu + eps * std)                                   # (N,128), pads == 0

    # ----- mean over timesteps: rows are b-major (row = b*T + t, T == 8) so this is
    #       an aligned (B, 8, 128) sublane reduce -----
    enc = jnp.sum(z.reshape(B, T, LANE), axis=1) * (1.0 / T)       # (B,128)
    enc_ref[...] = enc

    # ----- KL( N(mu, std) || N(0,1) ).mean() -----
    # per-element kl = 0.5*mu^2 + [0.5*(var - log var - 1)]; the bracket ("klrow")
    # depends only on log_var and was precomputed host-side.  Padded lanes of mu and
    # klrow are exactly 0 so they do not contribute.
    klrow = p_ref[offs["klrow"]:offs["klrow"] + 1, :]              # (1,128), pads == 0
    loss_ref[0, 0] = (0.5 * jnp.sum(mu * mu) + float(N) * jnp.sum(klrow)) * (
        1.0 / (N * E))

    # ----- classifier FlattenMlp; re-inject the constant-1 lane at column E of enc
    #       so the classifier biases also ride the MXU -----
    lane_id = jax.lax.broadcasted_iota(jnp.int32, (B, LANE), 1)
    c = jnp.where(lane_id == E, 1.0, enc)
    c = jnp.maximum(jnp.dot(c, W("cw1"), preferred_element_type=jnp.float32), 0.0)
    c = jnp.maximum(jnp.dot(c, W("cw2"), preferred_element_type=jnp.float32), 0.0)
    logits_ref[...] = jnp.dot(c, W("cw3"), preferred_element_type=jnp.float32)


def pack_params(params):
    """Pack all parameters into ONE lane-dense (784, 128) f32 slab (single input DMA).

    Each weight matrix becomes a full 128x128 block: the logical (K, M) weights live
    in [:K, :M], the bias in row K (consumed by the constant-1 lane of the layer
    input), an optional 1.0 at (K, ones_out_col) that regenerates the constant-1 lane
    for the next layer, zeros everywhere else.  Parameter-only math (exp/clip/sqrt/
    log of log_var) is done here once; the slab is cacheable across calls.
    """
    (w1, b1, w2, b2, w3, b3, logvar, cw1, cb1, cw2, cb2, cw3, cb3) = params
    din, H = w1.shape
    E = w3.shape[1]
    NT = cw3.shape[1]
    assert max(din + 1, H + 1, E + 1, NT) <= LANE
    f32 = lambda a: jnp.asarray(a, jnp.float32)

    def fold(w, b, ones_out_col=None):
        K, M = w.shape
        blk = jnp.zeros((LANE, LANE), jnp.float32)
        blk = blk.at[:K, :M].set(f32(w))
        blk = blk.at[K, :M].set(f32(b)[0])           # bias as an extra weight row
        if ones_out_col is not None:
            blk = blk.at[K, ones_out_col].set(1.0)   # carry the constant-1 lane forward
        return blk

    cvar = jnp.clip(jnp.exp(f32(logvar)), 0.1, 10.0)                 # (1, E)
    std_row = jnp.zeros((8, LANE), jnp.float32).at[0, :E].set(jnp.sqrt(cvar)[0])
    kl_row = jnp.zeros((8, LANE), jnp.float32).at[0, :E].set(
        (0.5 * (cvar - jnp.log(cvar) - 1.0))[0])                     # param-only KL part

    pieces = [("w1", fold(w1, b1, H)), ("w2", fold(w2, b2, H)), ("w3", fold(w3, b3)),
              ("cw1", fold(cw1, cb1, H)), ("cw2", fold(cw2, cb2, H)),
              ("cw3", fold(cw3, cb3)), ("std", std_row), ("klrow", kl_row)]
    offsets, blocks, row = {}, [], 0
    for name, blk in pieces:
        offsets[name] = row                           # static Python ints
        blocks.append(blk)
        row += blk.shape[0]
    slab = jnp.concatenate(blocks, axis=0)            # (6*128 + 8 + 8, 128) = (784, 128)
    meta = dict(din=din, hidden=H, embed=E, num_tasks=NT, offsets=offsets)
    return slab, meta


def context_classifier_forward(obs, actions, rewards, next_obs, terms, eps, slab, meta):
    T, B, _ = obs.shape
    N = T * B
    din, E, NT = meta["din"], meta["embed"], meta["num_tasks"]

    def bmajor(a):        # (T, B, f) -> (N, f) with row = b*T + t (aligned T-reduce)
        return jnp.transpose(a, (1, 0, 2)).reshape(N, -1).astype(jnp.float32)

    # One lane-aligned data slab: x in columns [0:128) (features, a constant 1.0 at
    # column din for the bias fold, zeros), eps in columns [128:256).
    feats = jnp.concatenate(
        [bmajor(a) for a in (obs, actions, rewards, next_obs, terms)], axis=-1)
    x_blk = jnp.concatenate(
        [feats, jnp.ones((N, 1), jnp.float32),
         jnp.zeros((N, LANE - din - 1), jnp.float32)], axis=-1)
    eps_blk = jnp.concatenate(
        [bmajor(eps), jnp.zeros((N, LANE - E), jnp.float32)], axis=-1)
    data = jnp.concatenate([x_blk, eps_blk], axis=-1)                # (N, 256)

    kernel = functools.partial(_context_classifier_kernel,
                               T=T, B=B, E=E, offs=meta["offsets"])

    out_shape = (
        jax.ShapeDtypeStruct((B, LANE), jnp.float32),   # encoding, lane-dense
        jax.ShapeDtypeStruct((1, 1), jnp.float32),      # kl loss (scalar, SMEM)
        jax.ShapeDtypeStruct((B, LANE), jnp.float32),   # classifier logits, lane-dense
    )

    enc_p, loss, logits_p = pl.pallas_call(
        kernel,
        out_shape=out_shape,
        in_specs=(pl.BlockSpec(memory_space=pltpu.MemorySpace.VMEM),
                  pl.BlockSpec(memory_space=pltpu.MemorySpace.VMEM)),
        out_specs=(pl.BlockSpec(memory_space=pltpu.MemorySpace.VMEM),
                   pl.BlockSpec(memory_space=pltpu.MemorySpace.SMEM),
                   pl.BlockSpec(memory_space=pltpu.MemorySpace.VMEM)),
    )(data, slab)
    return enc_p[:, :E], loss[0, 0], logits_p[:, :NT]


def _reference_forward(obs, actions, rewards, next_obs, terms, params, eps):
    # pure-JAX reference mirroring the PyTorch module (stochasity=True path)
    (w1, b1, w2, b2, w3, b3, logvar, cw1, cb1, cw2, cb2, cw3, cb3) = params
    T, B, _ = obs.shape
    N = T * B
    x = jnp.concatenate(
        [a.reshape(N, -1) for a in (obs, actions, rewards, next_obs, terms)], axis=-1)
    h = jax.nn.relu(x @ w1 + b1)
    h = jax.nn.relu(h @ w2 + b2)
    mu = h @ w3 + b3
    cvar = jnp.clip(jnp.exp(logvar), 0.1, 10.0)
    std = jnp.sqrt(cvar)
    out = mu + eps.reshape(N, -1) * std
    z = jnp.tanh(out).reshape(T, B, -1).mean(0)
    kl = -0.5 * jnp.log(cvar) + 0.5 * (cvar + mu * mu) - 0.5
    loss = jnp.mean(kl)
    c = jax.nn.relu(z @ cw1 + cb1)
    c = jax.nn.relu(c @ cw2 + cb2)
    logits = c @ cw3 + cb3
    return z, loss, logits


def _init_params(key, din, hidden, embed, num_tasks):
    ks = jax.random.split(key, 6)

    def lin(k, i, o, scale=0.1):
        return (scale * jax.random.normal(k, (i, o), jnp.float32),
                jnp.zeros((1, o), jnp.float32))

    w1, b1 = lin(ks[0], din, hidden)
    w2, b2 = lin(ks[1], hidden, hidden)
    w3, b3 = lin(ks[2], hidden, embed)
    logvar = jnp.zeros((1, embed), jnp.float32)            # nn.Parameter(zeros(1, E))
    cw1, cb1 = lin(ks[3], embed, hidden)
    cw2, cb2 = lin(ks[4], hidden, hidden)
    cw3, cb3 = lin(ks[5], hidden, num_tasks)
    return (w1, b1, w2, b2, w3, b3, logvar, cw1, cb1, cw2, cb2, cw3, cb3)


if __name__ == "__main__":
    # small shapes consistent with the module defaults
    T, B = 8, 2
    state_size, action_size, reward_size, term_size = 2, 2, 1, 1
    hidden, embed, num_tasks = 64, 32, 20
    din = 2 * state_size + action_size + reward_size + term_size   # 8

    key = jax.random.PRNGKey(0)
    k_obs, k_act, k_rew, k_nobs, k_term, k_eps, k_par = jax.random.split(key, 7)

    obs      = jax.random.normal(k_obs,  (T, B, state_size),  jnp.float32)
    actions  = jax.random.normal(k_act,  (T, B, action_size), jnp.float32)
    rewards  = jax.random.normal(k_rew,  (T, B, reward_size), jnp.float32)
    next_obs = jax.random.normal(k_nobs, (T, B, state_size),  jnp.float32)
    terms    = (jax.random.uniform(k_term, (T, B, term_size)) > 0.9).astype(jnp.float32)
    eps      = jax.random.normal(k_eps, (T, B, embed), jnp.float32)

    params = _init_params(k_par, din, hidden, embed, num_tasks)
    slab, meta = pack_params(params)          # cacheable: depends only on parameters

    enc, loss, logits = context_classifier_forward(
        obs, actions, rewards, next_obs, terms, eps, slab, meta)
    jax.block_until_ready((enc, loss, logits))

    enc_r, loss_r, logits_r = _reference_forward(
        obs, actions, rewards, next_obs, terms, params, eps)

    assert enc.shape == (B, embed) and logits.shape == (B, num_tasks)
    assert jnp.allclose(enc, enc_r, atol=1e-5, rtol=1e-5)
    assert jnp.allclose(loss, loss_r, atol=1e-5, rtol=1e-5)
    assert jnp.allclose(logits, logits_r, atol=1e-5, rtol=1e-5)
    print("KERNEL_OK")
</pallas_src>

<mosaic_0001>
module attributes {stable_mosaic.version = 11 : i64} {
  func.func @_context_classifier_kernel(%arg0: memref<16x256xf32, #tpu.memory_space<vmem>>, %arg1: memref<784x128xf32, #tpu.memory_space<vmem>>, %arg2: memref<2x128xf32, #tpu.memory_space<vmem>>, %arg3: memref<1x1xf32, #tpu.memory_space<smem>>, %arg4: memref<2x128xf32, #tpu.memory_space<vmem>>) attributes {dimension_semantics = [], scalar_prefetch = 0 : i64, scratch_operands = 0 : i64, tpu.core_type = #tpu.core_type<tc>} {
    %c0 = arith.constant 0 : index
    %c0_0 = arith.constant 0 : index
    %0 = vector.load %arg0[%c0, %c0_0] : memref<16x256xf32, #tpu.memory_space<vmem>>, vector<16x128xf32>
    %c0_1 = arith.constant 0 : index
    %c128 = arith.constant 128 : index
    %1 = vector.load %arg0[%c0_1, %c128] : memref<16x256xf32, #tpu.memory_space<vmem>>, vector<16x128xf32>
    %c0_2 = arith.constant 0 : index
    %c0_3 = arith.constant 0 : index
    %2 = vector.load %arg1[%c0_2, %c0_3] : memref<784x128xf32, #tpu.memory_space<vmem>>, vector<128x128xf32>
    %cst = arith.constant dense<0.000000e+00> : vector<16x128xf32>
    %3 = tpu.matmul %0, %2, %cst {dimension_numbers = #tpu.dot_dimension_numbers<[1], [0], [0], [1], [0, 0, 1, 1], [], []>} : vector<16x128xf32>, vector<128x128xf32>, vector<16x128xf32> -> vector<16x128xf32>
    %cst_4 = arith.constant 0.000000e+00 : f32
    %4 = vector.broadcast %cst_4 : f32 to vector<16x128xf32>
    %5 = arith.maximumf %3, %4 : vector<16x128xf32>
    %c128_5 = arith.constant 128 : index
    %c0_6 = arith.constant 0 : index
    %6 = vector.load %arg1[%c128_5, %c0_6] : memref<784x128xf32, #tpu.memory_space<vmem>>, vector<128x128xf32>
    %cst_7 = arith.constant dense<0.000000e+00> : vector<16x128xf32>
    %7 = tpu.matmul %5, %6, %cst_7 {dimension_numbers = #tpu.dot_dimension_numbers<[1], [0], [0], [1], [0, 0, 1, 1], [], []>} : vector<16x128xf32>, vector<128x128xf32>, vector<16x128xf32> -> vector<16x128xf32>
    %cst_8 = arith.constant 0.000000e+00 : f32
    %8 = vector.broadcast %cst_8 : f32 to vector<16x128xf32>
    %9 = arith.maximumf %7, %8 : vector<16x128xf32>
    %c256 = arith.constant 256 : index
    %c0_9 = arith.constant 0 : index
    %10 = vector.load %arg1[%c256, %c0_9] : memref<784x128xf32, #tpu.memory_space<vmem>>, vector<128x128xf32>
    %cst_10 = arith.constant dense<0.000000e+00> : vector<16x128xf32>
    %11 = tpu.matmul %9, %10, %cst_10 {dimension_numbers = #tpu.dot_dimension_numbers<[1], [0], [0], [1], [0, 0, 1, 1], [], []>} : vector<16x128xf32>, vector<128x128xf32>, vector<16x128xf32> -> vector<16x128xf32>
    %c768 = arith.constant 768 : index
    %c0_11 = arith.constant 0 : index
    %12 = vector.load %arg1[%c768, %c0_11] : memref<784x128xf32, #tpu.memory_space<vmem>>, vector<1x128xf32>
    %13 = vector.broadcast %12 : vector<1x128xf32> to vector<16x128xf32>
    %14 = arith.mulf %1, %13 : vector<16x128xf32>
    %15 = arith.addf %11, %14 : vector<16x128xf32>
    %16 = math.tanh %15 : vector<16x128xf32>
    %17 = vector.shape_cast %16 : vector<16x128xf32> to vector<2x8x128xf32>
    %cst_12 = arith.constant dense<0.000000e+00> : vector<2x128xf32>
    %18 = vector.multi_reduction <add>, %17, %cst_12 [1] : vector<2x8x128xf32> to vector<2x128xf32>
    %cst_13 = arith.constant 1.250000e-01 : f32
    %19 = vector.broadcast %cst_13 : f32 to vector<2x128xf32>
    %20 = arith.mulf %18, %19 : vector<2x128xf32>
    %c0_14 = arith.constant 0 : index
    %c0_15 = arith.constant 0 : index
    %21 = vector.load %arg2[%c0_14, %c0_15] : memref<2x128xf32, #tpu.memory_space<vmem>>, vector<2x128xf32>
    tpu.vector_store %arg2[%c0_14, %c0_15], %20 {strides = array<i32>} : memref<2x128xf32, #tpu.memory_space<vmem>>, vector<2x128xf32>,
    %c776 = arith.constant 776 : index
    %c0_16 = arith.constant 0 : index
    %22 = vector.load %arg1[%c776, %c0_16] : memref<784x128xf32, #tpu.memory_space<vmem>>, vector<1x128xf32>
    %23 = arith.mulf %11, %11 : vector<16x128xf32>
    %24 = vector.shape_cast %23 : vector<16x128xf32> to vector<1x16x128xf32>
    %cst_17 = arith.constant dense<0.000000e+00> : vector<1xf32>
    %25 = vector.multi_reduction <add>, %24, %cst_17 [1, 2] : vector<1x16x128xf32> to vector<1xf32>
    %26 = vector.shape_cast %25 : vector<1xf32> to vector<1x1x1xf32>
    %27 = vector.extract %26[0, 0, 0] : f32 from vector<1x1x1xf32>
    %cst_18 = arith.constant 5.000000e-01 : f32
    %28 = arith.mulf %cst_18, %27 : f32
    %29 = vector.shape_cast %22 : vector<1x128xf32> to vector<1x1x128xf32>
    %cst_19 = arith.constant dense<0.000000e+00> : vector<1xf32>
    %30 = vector.multi_reduction <add>, %29, %cst_19 [1, 2] : vector<1x1x128xf32> to vector<1xf32>
    %31 = vector.shape_cast %30 : vector<1xf32> to vector<1x1x1xf32>
    %32 = vector.extract %31[0, 0, 0] : f32 from vector<1x1x1xf32>
    %cst_20 = arith.constant 1.600000e+01 : f32
    %33 = arith.mulf %cst_20, %32 : f32
    %34 = arith.addf %28, %33 : f32
    %cst_21 = arith.constant 0.001953125 : f32
    %35 = arith.mulf %34, %cst_21 : f32
    %c0_22 = arith.constant 0 : index
    %c0_23 = arith.constant 0 : index
    %36 = memref.load %arg3[%c0_22, %c0_23] : memref<1x1xf32, #tpu.memory_space<smem>>
    memref.store %35, %arg3[%c0_22, %c0_23] : memref<1x1xf32, #tpu.memory_space<smem>>
    %37 = tpu.iota {dimensions = array<i32: 1>} : vector<2x128xi32>
    %c32_i32 = arith.constant 32 : i32
    %38 = vector.broadcast %c32_i32 : i32 to vector<2x128xi32>
    %39 = arith.cmpi eq, %37, %38 : vector<2x128xi32>
    %cst_24 = arith.constant 1.000000e+00 : f32
    %40 = vector.broadcast %cst_24 : f32 to vector<2x128xf32>
    %41 = arith.select %39, %40, %20 : vector<2x128xi1>, vector<2x128xf32>
    %c384 = arith.constant 384 : index
    %c0_25 = arith.constant 0 : index
    %42 = vector.load %arg1[%c384, %c0_25] : memref<784x128xf32, #tpu.memory_space<vmem>>, vector<128x128xf32>
    %cst_26 = arith.constant dense<0.000000e+00> : vector<2x128xf32>
    %43 = tpu.matmul %41, %42, %cst_26 {dimension_numbers = #tpu.dot_dimension_numbers<[1], [0], [0], [1], [0, 0, 1, 1], [], []>} : vector<2x128xf32>, vector<128x128xf32>, vector<2x128xf32> -> vector<2x128xf32>
    %cst_27 = arith.constant 0.000000e+00 : f32
    %44 = vector.broadcast %cst_27 : f32 to vector<2x128xf32>
    %45 = arith.maximumf %43, %44 : vector<2x128xf32>
    %c512 = arith.constant 512 : index
    %c0_28 = arith.constant 0 : index
    %46 = vector.load %arg1[%c512, %c0_28] : memref<784x128xf32, #tpu.memory_space<vmem>>, vector<128x128xf32>
    %cst_29 = arith.constant dense<0.000000e+00> : vector<2x128xf32>
    %47 = tpu.matmul %45, %46, %cst_29 {dimension_numbers = #tpu.dot_dimension_numbers<[1], [0], [0], [1], [0, 0, 1, 1], [], []>} : vector<2x128xf32>, vector<128x128xf32>, vector<2x128xf32> -> vector<2x128xf32>
    %cst_30 = arith.constant 0.000000e+00 : f32
    %48 = vector.broadcast %cst_30 : f32 to vector<2x128xf32>
    %49 = arith.maximumf %47, %48 : vector<2x128xf32>
    %c640 = arith.constant 640 : index
    %c0_31 = arith.constant 0 : index
    %50 = vector.load %arg1[%c640, %c0_31] : memref<784x128xf32, #tpu.memory_space<vmem>>, vector<128x128xf32>
    %cst_32 = arith.constant dense<0.000000e+00> : vector<2x128xf32>
    %51 = tpu.matmul %49, %50, %cst_32 {dimension_numbers = #tpu.dot_dimension_numbers<[1], [0], [0], [1], [0, 0, 1, 1], [], []>} : vector<2x128xf32>, vector<128x128xf32>, vector<2x128xf32> -> vector<2x128xf32>
    %c0_33 = arith.constant 0 : index
    %c0_34 = arith.constant 0 : index
    %52 = vector.load %arg4[%c0_33, %c0_34] : memref<2x128xf32, #tpu.memory_space<vmem>>, vector<2x128xf32>
    tpu.vector_store %arg4[%c0_33, %c0_34], %51 {strides = array<i32>} : memref<2x128xf32, #tpu.memory_space<vmem>>, vector<2x128xf32>,
    return
  }
}

</mosaic_0001>

<llo_original>
// kernel: tpu_custom_call.1
$region0: #{tpu_custom_call.1}
  #allocation0 [shape = 'u32[]', space=smem, size = 0x4, offset = 0x4, fixed_abs, tag = 'smem constant byte address 0x4 - core index']
  #allocation1 [shape = 'u32[72,128]{1,0:T(1,128)}', space=vmem, size = 0x9000, scoped, tag = 'internal scratch']
  %s0 = inlined_call_operand.hbm [shape: f32[16,256], index: 0, kind: input, shape index: {}]
  %s1 = inlined_call_operand.hbm [shape: f32[784,128], index: 1, kind: input, shape index: {}]
  %s2 = inlined_call_operand.hbm [shape: f32[2,128], index: 2, kind: output, shape index: {0}]
  %s3 = inlined_call_operand.hbm [shape: f32[1,1], index: 3, kind: output, shape index: {1}]
  %s4 = inlined_call_operand.hbm [shape: f32[2,128], index: 4, kind: output, shape index: {2}]
  %5 = xla_tuple %s2, %s3, %s4
  %s6 = sld [smem:[#allocation0]]
  $region42: #{tpu_custom_call.1} parent=0
    _
  %s8 = ssub.s32 1, %s6
  %s9 = scalar_select 0, %s8, %s6
  $region1: #{tpu_custom_call.1} parent=0
    #allocation2 [shape = 'u8[16384]{0}', space=vmem, size = 0x4000, scoped, tag = 'input window, operand 0, single buffered']
    #allocation3 [shape = 's32[1]{0}', space=sflag, size = 0x4, scoped, tag = 'scoped memory for tpu_custom_call.1']
    #allocation4 [shape = 's32[1]{0}', space=sflag, size = 0x4, scoped, tag = 'scoped memory for tpu_custom_call.1']
    #allocation5 [shape = 's32[1]{0}', space=sflag, size = 0x4, scoped, tag = 'scoped memory for tpu_custom_call.1']
    #allocation6 [shape = 'u8[401408]{0}', space=vmem, size = 0x62000, scoped, tag = 'input window, operand 1, single buffered']
    #allocation7 [shape = 's32[1]{0}', space=sflag, size = 0x4, scoped, tag = 'scoped memory for tpu_custom_call.1']
    #allocation8 [shape = 'u8[1024]{0}', space=vmem, size = 0x400, scoped, tag = 'output window, operand 0, single buffered']
    #allocation9 [shape = 'u8[512]{0}', space=smem, size = 0x200, scoped, tag = 'output window, operand 1, single buffered']
    #allocation10 [shape = 'u8[1024]{0}', space=vmem, size = 0x400, scoped, tag = 'output window, operand 2, single buffered']
    #allocation11 [shape = 's32[1]{0}', space=sflag, size = 0x4, scoped, tag = 'scoped memory for tpu_custom_call.1']
    %10 = vsyncpa [#allocation3], 0
    %11 = vsyncpa [#allocation7], 0
    %12 = vsyncpa [#allocation4], 0
    %13 = vsyncpa [#allocation5], 0
    %14 = vsyncpa [#allocation11], 0
    // Predicated region
    $region2: #{tpu_custom_call.1} parent=1 // pred_check
      _
    $region3: #{tpu_custom_call.1} parent=1 // pred_check_branch
      %16 = sbr.rel (0) target = $region5
    $region4: #{tpu_custom_call.1} parent=1 // pred_region
      %18 = vsyncadd [#allocation3], 0
      %s19 = sshll.u32 %s0, 4
      %s20 = int_to_ptr.hbm [resolvable:$true] %s19
      %s21 = sshll.u32 [#allocation2], 4
      %s22 = int_to_ptr.vmem [resolvable:$true] %s21
      %27 = dma.hbm_to_vmem [thread:$0]  %s20, 512, %s22, [#allocation3], 256, 256, 16
    $region5: #{tpu_custom_call.1} parent=1 // pred_fallthru
      _
    // Predicated region
    $region6: #{tpu_custom_call.1} parent=1 // pred_check
      _
    $region7: #{tpu_custom_call.1} parent=1 // pred_check_branch
      %29 = sbr.rel (0) target = $region9
    $region8: #{tpu_custom_call.1} parent=1 // pred_region
      %31 = vsyncadd [#allocation7], 0
      %s32 = sshll.u32 %s1, 4
      %s33 = int_to_ptr.hbm [resolvable:$true] %s32
      %s34 = sshll.u32 [#allocation6], 4
      %s35 = int_to_ptr.vmem [resolvable:$true] %s34
      %40 = dma.hbm_to_vmem [thread:$0]  %s33, 12544, %s35, [#allocation7], 128, 128, 8
    $region9: #{tpu_custom_call.1} parent=1 // pred_fallthru
      _
    // Predicated region
    $region10: #{tpu_custom_call.1} parent=1 // pred_check
      _
    $region11: #{tpu_custom_call.1} parent=1 // pred_check_branch
      %42 = sbr.rel (0) target = $region13
    $region12: #{tpu_custom_call.1} parent=1 // pred_region
      %44 = dma.done [#allocation3], 512
    $region13: #{tpu_custom_call.1} parent=1 // pred_fallthru
      _
    // Predicated region
    $region14: #{tpu_custom_call.1} parent=1 // pred_check
      _
    $region15: #{tpu_custom_call.1} parent=1 // pred_check_branch
      %46 = sbr.rel (0) target = $region17
    $region16: #{tpu_custom_call.1} parent=1 // pred_region
      %48 = dma.done [#allocation7], 12544
    $region17: #{tpu_custom_call.1} parent=1 // pred_fallthru
      _
    %v49 = vld [vmem:[#allocation2] sm:$0xff]
    %v50 = vld [vmem:[#allocation2 + $0x10] sm:$0xff]
    %v51 = vld [vmem:[#allocation2 + $0x8] sm:$0xff]
    %v52 = vld [vmem:[#allocation2 + $0x18] sm:$0xff]
    %v53 = vld [vmem:[#allocation6] sm:$0xff]
    %v54 = vld [vmem:[#allocation6 + $0x8] sm:$0xff]
    %v55 = vld [vmem:[#allocation6 + $0x10] sm:$0xff]
    %v56 = vld [vmem:[#allocation6 + $0x18] sm:$0xff]
    %v57 = vld [vmem:[#allocation6 + $0x20] sm:$0xff]
    %v58 = vld [vmem:[#allocation6 + $0x28] sm:$0xff]
    %v59 = vld [vmem:[#allocation6 + $0x30] sm:$0xff]
    %v60 = vld [vmem:[#allocation6 + $0x38] sm:$0xff]
    %v61 = vld [vmem:[#allocation6 + $0x40] sm:$0xff]
    %v62 = vld [vmem:[#allocation6 + $0x48] sm:$0xff]
    %v63 = vld [vmem:[#allocation6 + $0x50] sm:$0xff]
    %v64 = vld [vmem:[#allocation6 + $0x58] sm:$0xff]
    %v65 = vld [vmem:[#allocation6 + $0x60] sm:$0xff]
    %v66 = vld [vmem:[#allocation6 + $0x68] sm:$0xff]
    %v67 = vld [vmem:[#allocation6 + $0x70] sm:$0xff]
    %v68 = vld [vmem:[#allocation6 + $0x78] sm:$0xff]
    %69 = vmatpush.msra.mxu0 %v68
    %70 = vmatpush.msra.mxu0 %v67
    %71 = vmatpush.msra.mxu0 %v66
    %72 = vmatpush.msra.mxu0 %v65
    %73 = vmatpush.msra.mxu0 %v64
    %74 = vmatpush.msra.mxu0 %v63
    %75 = vmatpush.msra.mxu0 %v62
    %76 = vmatpush.msra.mxu0 %v61
    %77 = vmatpush.msra.mxu0 %v60
    %78 = vmatpush.msra.mxu0 %v59
    %79 = vmatpush.msra.mxu0 %v58
    %80 = vmatpush.msra.mxu0 %v57
    %81 = vmatpush.msra.mxu0 %v56
    %82 = vmatpush.msra.mxu0 %v55
    %83 = vmatpush.msra.mxu0 %v54
    %84 = vmatpush.msra.mxu0 %v53
    %85 = vmatmul.f32.gmra.mxu0 %v49
    %v86 = vpop.f32.mrf.mxu0
    %v87 = vadd.f32 0.0, %v86
    %88 = vmatmul.f32.gmra.mxu0 %v50
    %v89 = vpop.f32.mrf.mxu0
    %v90 = vadd.f32 0.0, %v89
    %91 = vdwg.mxu0
    %v92 = vmax.f32 %v87, 0.0
    %v93 = vmax.f32 %v90, 0.0
    %v94 = vld [vmem:[#allocation6 + $0x80] sm:$0xff]
    %v95 = vld [vmem:[#allocation6 + $0x88] sm:$0xff]
    %v96 = vld [vmem:[#allocation6 + $0x90] sm:$0xff]
    %v97 = vld [vmem:[#allocation6 + $0x98] sm:$0xff]
    %v98 = vld [vmem:[#allocation6 + $0xa0] sm:$0xff]
    %v99 = vld [vmem:[#allocation6 + $0xa8] sm:$0xff]
    %v100 = vld [vmem:[#allocation6 + $0xb0] sm:$0xff]
    %v101 = vld [vmem:[#allocation6 + $0xb8] sm:$0xff]
    %v102 = vld [vmem:[#allocation6 + $0xc0] sm:$0xff]
    %v103 = vld [vmem:[#allocation6 + $0xc8] sm:$0xff]
    %v104 = vld [vmem:[#allocation6 + $0xd0] sm:$0xff]
    %v105 = vld [vmem:[#allocation6 + $0xd8] sm:$0xff]
    %v106 = vld [vmem:[#allocation6 + $0xe0] sm:$0xff]
    %v107 = vld [vmem:[#allocation6 + $0xe8] sm:$0xff]
    %v108 = vld [vmem:[#allocation6 + $0xf0] sm:$0xff]
    %v109 = vld [vmem:[#allocation6 + $0xf8] sm:$0xff]
    %110 = vmatpush.msra.mxu0 %v109
    %111 = vmatpush.msra.mxu0 %v108
    %112 = vmatpush.msra.mxu0 %v107
    %113 = vmatpush.msra.mxu0 %v106
    %114 = vmatpush.msra.mxu0 %v105
    %115 = vmatpush.msra.mxu0 %v104
    %116 = vmatpush.msra.mxu0 %v103
    %117 = vmatpush.msra.mxu0 %v102
    %118 = vmatpush.msra.mxu0 %v101
    %119 = vmatpush.msra.mxu0 %v100
    %120 = vmatpush.msra.mxu0 %v99
    %121 = vmatpush.msra.mxu0 %v98
    %122 = vmatpush.msra.mxu0 %v97
    %123 = vmatpush.msra.mxu0 %v96
    %124 = vmatpush.msra.mxu0 %v95
    %125 = vmatpush.msra.mxu0 %v94
    %126 = vmatmul.f32.gmra.mxu0 %v92
    %v127 = vpop.f32.mrf.mxu0
    %v128 = vadd.f32 0.0, %v127
    %129 = vmatmul.f32.gmra.mxu0 %v93
    %v130 = vpop.f32.mrf.mxu0
    %v131 = vadd.f32 0.0, %v130
    %132 = vdwg.mxu0
    %v133 = vmax.f32 %v128, 0.0
    %v134 = vmax.f32 %v131, 0.0
    %v135 = vld [vmem:[#allocation6 + $0x100] sm:$0xff]
    %v136 = vld [vmem:[#allocation6 + $0x108] sm:$0xff]
    %v137 = vld [vmem:[#allocation6 + $0x110] sm:$0xff]
    %v138 = vld [vmem:[#allocation6 + $0x118] sm:$0xff]
    %v139 = vld [vmem:[#allocation6 + $0x120] sm:$0xff]
    %v140 = vld [vmem:[#allocation6 + $0x128] sm:$0xff]
    %v141 = vld [vmem:[#allocation6 + $0x130] sm:$0xff]
    %v142 = vld [vmem:[#allocation6 + $0x138] sm:$0xff]
    %v143 = vld [vmem:[#allocation6 + $0x140] sm:$0xff]
    %v144 = vld [vmem:[#allocation6 + $0x148] sm:$0xff]
    %v145 = vld [vmem:[#allocation6 + $0x150] sm:$0xff]
    %v146 = vld [vmem:[#allocation6 + $0x158] sm:$0xff]
    %v147 = vld [vmem:[#allocation6 + $0x160] sm:$0xff]
    %v148 = vld [vmem:[#allocation6 + $0x168] sm:$0xff]
    %v149 = vld [vmem:[#allocation6 + $0x170] sm:$0xff]
    %v150 = vld [vmem:[#allocation6 + $0x178] sm:$0xff]
    %151 = vmatpush.msra.mxu0 %v150
    %152 = vmatpush.msra.mxu0 %v149
    %153 = vmatpush.msra.mxu0 %v148
    %154 = vmatpush.msra.mxu0 %v147
    %155 = vmatpush.msra.mxu0 %v146
    %156 = vmatpush.msra.mxu0 %v145
    %157 = vmatpush.msra.mxu0 %v144
    %158 = vmatpush.msra.mxu0 %v143
    %159 = vmatpush.msra.mxu0 %v142
    %160 = vmatpush.msra.mxu0 %v141
    %161 = vmatpush.msra.mxu0 %v140
    %162 = vmatpush.msra.mxu0 %v139
    %163 = vmatpush.msra.mxu0 %v138
    %164 = vmatpush.msra.mxu0 %v137
    %165 = vmatpush.msra.mxu0 %v136
    %166 = vmatpush.msra.mxu0 %v135
    %167 = vmatmul.f32.gmra.mxu0 %v133
    %v168 = vpop.f32.mrf.mxu0
    %v169 = vadd.f32 0.0, %v168
    %170 = vmatmul.f32.gmra.mxu0 %v134
    %v171 = vpop.f32.mrf.mxu0
    %v172 = vadd.f32 0.0, %v171
    %173 = vdwg.mxu0
    %v174 = vld [vmem:[#allocation6 + $0x300] sm:$0x1]
    %v175 = vperm.slane %v174, 0
    %v176 = vmul.f32 %v51, %v175
    %v177 = vmul.f32 %v52, %v175
    %v178 = vadd.f32 %v169, %v176
    %v179 = vadd.f32 %v172, %v177
    %v180 = vtanh.pop %v178
    %v181 = vtanh.pop %v179
    %v182 = vrot.slane %v180, 4
    %v183 = vadd.f32 %v180, %v182
    %v184 = vrot.slane %v183, 2
    %v185 = vadd.f32 %v183, %v184
    %v186 = vrot.slane %v185, 1
    %v187 = vadd.f32 %v185, %v186
    %v188 = vrot.slane %v181, 4
    %v189 = vadd.f32 %v181, %v188
    %v190 = vrot.slane %v189, 2
    %v191 = vadd.f32 %v189, %v190
    %v192 = vrot.slane %v191, 1
    %v193 = vadd.f32 %v191, %v192
    %v194 = vmul.f32 %v187, 0.125
    %v195 = vmul.f32 %v193, 0.125
    %vm198 = vcmask 1041409
    %v199 = vsel %vm198, %v195, %v194
    %201 = vst [vmem:[#allocation8] sm:$0x3] %v199
    %v202 = vld [vmem:[#allocation6 + $0x308] sm:$0x1]
    %v203 = vmul.f32 %v169, %v169
    %v204 = vmul.f32 %v172, %v172
    %v205 = vadd.f32 %v203, %v204
    %206 = vadd.xlane.f32.xlu0 %v205
    %v207 = vpop.xlane.xlu0 %206
    %v208 = vrot.slane %v207, 4
    %v209 = vadd.f32 %v207, %v208
    %v210 = vrot.slane %v209, 2
    %v211 = vadd.f32 %v209, %v210
    %v212 = vrot.slane %v211, 1
    %v213 = vadd.f32 %v211, %v212
    %s214 = vtos %v213
    %s215 = smul.f32 %s214, 0.5
    %vm216 = vcmask 1040384
    %v217 = vsel %vm216, %v202, 0.0
    %218 = vadd.xlane.f32.xlu0 %v217
    %v219 = vpop.xlane.xlu0 %218
    %v220 = vrot.slane %v219, 4
    %v221 = vadd.f32 %v219, %v220
    %v222 = vrot.slane %v221, 2
    %v223 = vadd.f32 %v221, %v222
    %v224 = vrot.slane %v223, 1
    %v225 = vadd.f32 %v223, %v224
    %s226 = vtos %v225
    %s227 = smul.f32 %s226, 16.0
    %s228 = sadd.f32 %s215, %s227
    %s229 = smul.f32 %s228, 0.001953125
    %s230 = scalar_lea.smem [#allocation9], 0
    %231 = sst [smem:[%s230]] %s229
    %v232 = vlaneseq
    %v233 = vand.u32 %v232, 127
    %vm234 = vcmp.eq.s32.totalorder %v233, 32
    %v235 = vsel %vm234, 1.0, %v199
    %v236 = vld [vmem:[#allocation6 + $0x180] sm:$0xff]
    %v237 = vld [vmem:[#allocation6 + $0x188] sm:$0xff]
    %v238 = vld [vmem:[#allocation6 + $0x190] sm:$0xff]
    %v239 = vld [vmem:[#allocation6 + $0x198] sm:$0xff]
    %v240 = vld [vmem:[#allocation6 + $0x1a0] sm:$0xff]
    %v241 = vld [vmem:[#allocation6 + $0x1a8] sm:$0xff]
    %v242 = vld [vmem:[#allocation6 + $0x1b0] sm:$0xff]
    %v243 = vld [vmem:[#allocation6 + $0x1b8] sm:$0xff]
    %v244 = vld [vmem:[#allocation6 + $0x1c0] sm:$0xff]
    %v245 = vld [vmem:[#allocation6 + $0x1c8] sm:$0xff]
    %v246 = vld [vmem:[#allocation6 + $0x1d0] sm:$0xff]
    %v247 = vld [vmem:[#allocation6 + $0x1d8] sm:$0xff]
    %v248 = vld [vmem:[#allocation6 + $0x1e0] sm:$0xff]
    %v249 = vld [vmem:[#allocation6 + $0x1e8] sm:$0xff]
    %v250 = vld [vmem:[#allocation6 + $0x1f0] sm:$0xff]
    %v251 = vld [vmem:[#allocation6 + $0x1f8] sm:$0xff]
    %252 = vmatpush.msra.mxu0 %v251
    %253 = vmatpush.msra.mxu0 %v250
    %254 = vmatpush.msra.mxu0 %v249
    %255 = vmatpush.msra.mxu0 %v248
    %256 = vmatpush.msra.mxu0 %v247
    %257 = vmatpush.msra.mxu0 %v246
    %258 = vmatpush.msra.mxu0 %v245
    %259 = vmatpush.msra.mxu0 %v244
    %260 = vmatpush.msra.mxu0 %v243
    %261 = vmatpush.msra.mxu0 %v242
    %262 = vmatpush.msra.mxu0 %v241
    %263 = vmatpush.msra.mxu0 %v240
    %264 = vmatpush.msra.mxu0 %v239
    %265 = vmatpush.msra.mxu0 %v238
    %266 = vmatpush.msra.mxu0 %v237
    %267 = vmatpush.msra.mxu0 %v236
    %268 = vmatmul.f32.gmra.mxu0 %v235
    %v269 = vpop.f32.mrf.mxu0
    %v270 = vadd.f32 0.0, %v269
    %271 = vdwg.mxu0
    %v272 = vmax.f32 %v270, 0.0
    %v273 = vld [vmem:[#allocation6 + $0x200] sm:$0xff]
    %v274 = vld [vmem:[#allocation6 + $0x208] sm:$0xff]
    %v275 = vld [vmem:[#allocation6 + $0x210] sm:$0xff]
    %v276 = vld [vmem:[#allocation6 + $0x218] sm:$0xff]
    %v277 = vld [vmem:[#allocation6 + $0x220] sm:$0xff]
    %v278 = vld [vmem:[#allocation6 + $0x228] sm:$0xff]
    %v279 = vld [vmem:[#allocation6 + $0x230] sm:$0xff]
    %v280 = vld [vmem:[#allocation6 + $0x238] sm:$0xff]
    %v281 = vld [vmem:[#allocation6 + $0x240] sm:$0xff]
    %v282 = vld [vmem:[#allocation6 + $0x248] sm:$0xff]
    %v283 = vld [vmem:[#allocation6 + $0x250] sm:$0xff]
    %v284 = vld [vmem:[#allocation6 + $0x258] sm:$0xff]
    %v285 = vld [vmem:[#allocation6 + $0x260] sm:$0xff]
    %v286 = vld [vmem:[#allocation6 + $0x268] sm:$0xff]
    %v287 = vld [vmem:[#allocation6 + $0x270] sm:$0xff]
    %v288 = vld [vmem:[#allocation6 + $0x278] sm:$0xff]
    %289 = vmatpush.msra.mxu0 %v288
    %290 = vmatpush.msra.mxu0 %v287
    %291 = vmatpush.msra.mxu0 %v286
    %292 = vmatpush.msra.mxu0 %v285
    %293 = vmatpush.msra.mxu0 %v284
    %294 = vmatpush.msra.mxu0 %v283
    %295 = vmatpush.msra.mxu0 %v282
    %296 = vmatpush.msra.mxu0 %v281
    %297 = vmatpush.msra.mxu0 %v280
    %298 = vmatpush.msra.mxu0 %v279
    %299 = vmatpush.msra.mxu0 %v278
    %300 = vmatpush.msra.mxu0 %v277
    %301 = vmatpush.msra.mxu0 %v276
    %302 = vmatpush.msra.mxu0 %v275
    %303 = vmatpush.msra.mxu0 %v274
    %304 = vmatpush.msra.mxu0 %v273
    %305 = vmatmul.f32.gmra.mxu0 %v272
    %v306 = vpop.f32.mrf.mxu0
    %v307 = vadd.f32 0.0, %v306
    %308 = vdwg.mxu0
    %v309 = vmax.f32 %v307, 0.0
    %v310 = vld [vmem:[#allocation6 + $0x280] sm:$0xff]
    %v311 = vld [vmem:[#allocation6 + $0x288] sm:$0xff]
    %v312 = vld [vmem:[#allocation6 + $0x290] sm:$0xff]
    %v313 = vld [vmem:[#allocation6 + $0x298] sm:$0xff]
    %v314 = vld [vmem:[#allocation6 + $0x2a0] sm:$0xff]
    %v315 = vld [vmem:[#allocation6 + $0x2a8] sm:$0xff]
    %v316 = vld [vmem:[#allocation6 + $0x2b0] sm:$0xff]
    %v317 = vld [vmem:[#allocation6 + $0x2b8] sm:$0xff]
    %v318 = vld [vmem:[#allocation6 + $0x2c0] sm:$0xff]
    %v319 = vld [vmem:[#allocation6 + $0x2c8] sm:$0xff]
    %v320 = vld [vmem:[#allocation6 + $0x2d0] sm:$0xff]
    %v321 = vld [vmem:[#allocation6 + $0x2d8] sm:$0xff]
    %v322 = vld [vmem:[#allocation6 + $0x2e0] sm:$0xff]
    %v323 = vld [vmem:[#allocation6 + $0x2e8] sm:$0xff]
    %v324 = vld [vmem:[#allocation6 + $0x2f0] sm:$0xff]
    %v325 = vld [vmem:[#allocation6 + $0x2f8] sm:$0xff]
    %326 = vmatpush.msra.mxu0 %v325
    %327 = vmatpush.msra.mxu0 %v324
    %328 = vmatpush.msra.mxu0 %v323
    %329 = vmatpush.msra.mxu0 %v322
    %330 = vmatpush.msra.mxu0 %v321
    %331 = vmatpush.msra.mxu0 %v320
    %332 = vmatpush.msra.mxu0 %v319
    %333 = vmatpush.msra.mxu0 %v318
    %334 = vmatpush.msra.mxu0 %v317
    %335 = vmatpush.msra.mxu0 %v316
    %336 = vmatpush.msra.mxu0 %v315
    %337 = vmatpush.msra.mxu0 %v314
    %338 = vmatpush.msra.mxu0 %v313
    %339 = vmatpush.msra.mxu0 %v312
    %340 = vmatpush.msra.mxu0 %v311
    %341 = vmatpush.msra.mxu0 %v310
    %342 = vmatmul.f32.gmra.mxu0 %v309
    %v343 = vpop.f32.mrf.mxu0
    %v344 = vadd.f32 0.0, %v343
    %345 = vdwg.mxu0
    %346 = vst [vmem:[#allocation10] sm:$0x3] %v344
    // Predicated region
    $region18: #{tpu_custom_call.1} parent=1 // pred_check
      _
    $region19: #{tpu_custom_call.1} parent=1 // pred_check_branch
      %348 = sbr.rel (0) target = $region21
    $region20: #{tpu_custom_call.1} parent=1 // pred_region
      %350 = vsyncadd [#allocation4], 0
      %s352 = sshll.u32 [#allocation8], 4
      %s353 = int_to_ptr.vmem [resolvable:$true] %s352
      %s354 = sshll.u32 %s2, 4
      %s355 = int_to_ptr.hbm [resolvable:$true] %s354
      %357 = dma.vmem_to_hbm [thread:$0]  %s353, 32, %s355, [#allocation4]
    $region21: #{tpu_custom_call.1} parent=1 // pred_fallthru
      _
    // Predicated region
    $region22: #{tpu_custom_call.1} parent=1 // pred_check
      _
    $region23: #{tpu_custom_call.1} parent=1 // pred_check_branch
      %359 = sbr.rel (0) target = $region25
    $region24: #{tpu_custom_call.1} parent=1 // pred_region
      %361 = vsyncadd [#allocation5], 0
      %s363 = sshll.u32 %s3, 4
      %s364 = int_to_ptr.hbm [resolvable:$true] %s363
      %366 = dma.smem_to_hbm [#allocation9], 16, %s364, [#allocation5]
    $region25: #{tpu_custom_call.1} parent=1 // pred_fallthru
      _
    // Predicated region
    $region26: #{tpu_custom_call.1} parent=1 // pred_check
      _
    $region27: #{tpu_custom_call.1} parent=1 // pred_check_branch
      %368 = sbr.rel (0) target = $region29
    $region28: #{tpu_custom_call.1} parent=1 // pred_region
      %370 = vsyncadd [#allocation11], 0
      %s372 = sshll.u32 [#allocation10], 4
      %s373 = int_to_ptr.vmem [resolvable:$true] %s372
      %s374 = sshll.u32 %s4, 4
      %s375 = int_to_ptr.hbm [resolvable:$true] %s374
      %377 = dma.vmem_to_hbm [thread:$0]  %s373, 32, %s375, [#allocation11]
    $region29: #{tpu_custom_call.1} parent=1 // pred_fallthru
      _
    // Predicated region
    $region30: #{tpu_custom_call.1} parent=1 // pred_check
      _
    $region31: #{tpu_custom_call.1} parent=1 // pred_check_branch
      %379 = sbr.rel (0) target = $region33
    $region32: #{tpu_custom_call.1} parent=1 // pred_region
      %381 = dma.done [#allocation4], 32
    $region33: #{tpu_custom_call.1} parent=1 // pred_fallthru
      _
    // Predicated region
    $region34: #{tpu_custom_call.1} parent=1 // pred_check
      _
    $region35: #{tpu_custom_call.1} parent=1 // pred_check_branch
      %383 = sbr.rel (0) target = $region37
    $region36: #{tpu_custom_call.1} parent=1 // pred_region
      %385 = dma.done [#allocation5], 16
    $region37: #{tpu_custom_call.1} parent=1 // pred_fallthru
      _
    // Predicated region
    $region38: #{tpu_custom_call.1} parent=1 // pred_check
      _
    $region39: #{tpu_custom_call.1} parent=1 // pred_check_branch
      %387 = sbr.rel (0) target = $region41
    $region40: #{tpu_custom_call.1} parent=1 // pred_region
      %389 = dma.done [#allocation11], 32
    $region41: #{tpu_custom_call.1} parent=1 // pred_fallthru
      _
    %390 = sfence
    %391 = vsyncpa [#allocation3], 1
    %392 = vsyncpa [#allocation7], 1
    %393 = vsyncpa [#allocation4], 1
    %394 = vsyncpa [#allocation11], 1
    %395 = vsyncpa [#allocation5], 1

</llo_original>
